<compile_context>
chip_gen: v6e
topology: v6e:2x2x1
jax: 0.10.0
libtpu: 0.0.40
codegen_flags: <defaults>
</compile_context>

<pallas_src>
import functools

import jax
import jax.numpy as jnp
import numpy as np
from jax.experimental import pallas as pl
from jax.experimental.pallas import tpu as pltpu


def _attention_kernel(dl, d_row, bc, bs, lhs_ref, w_ref, out_ref):
    """Fused AttentionNet forward.

    lhs_ref: (rows_pad, d_row) f32.  Rows [0, bc) are constraints, rows
             [bc, bc+bs) are state, remaining rows are zero.  One zero-pad
             lane carries 1.0 for the live rows (bias lane).
    w_ref:   (d_row, 4*dl) f32 packed [Wq*s | Wk | Wv | Wo] with biases folded
             into the bias rows (bq*s, bk, bv in the activation ones-lane row;
             bo in the V ones-column row of the Wo block).
    out_ref: (rows_pad, dl) f32; rows [0, bc) x lanes [0, state_dim) are valid.
    """
    lhs = lhs_ref[...]                                               # (R, d_row)

    # Single fused projection matmul for Q|K|V of all stacked rows.
    proj = jnp.dot(lhs, w_ref[:, 0:3 * dl],
                   preferred_element_type=jnp.float32)               # (R, 3*dl)

    q = proj[:, 0:dl]                      # all rows; rows >= bc are junk queries,
                                           # sliced away on the host (finite, harmless)
    k = proj[bc:bc + bs, dl:2 * dl]        # state rows only -> (bs, dl)
    v = proj[bc:bc + bs, 2 * dl:3 * dl]    # state rows only; lane `hidden` == 1.0

    # scores = (Q / sqrt(H)) K^T  (scale already folded into Wq/bq).
    scores = jax.lax.dot_general(
        q, k,
        dimension_numbers=(((1,), (1,)), ((), ())),
        preferred_element_type=jnp.float32)                          # (R, bs)

    # Numerically stable softmax, exact division.
    scores = scores - jnp.max(scores, axis=-1, keepdims=True)
    p = jnp.exp(scores)
    weights = p / jnp.sum(p, axis=-1, keepdims=True)

    attn = jnp.dot(weights, v, preferred_element_type=jnp.float32)   # (R, dl)
    # attn[:, hidden] == sum(weights) == 1 -> picks up bo from Wo's extra row.

    out_ref[...] = jnp.dot(attn[:, 0:d_row], w_ref[:, 3 * dl:4 * dl],
                           preferred_element_type=jnp.float32)       # (R, dl)


def init_attention_net_params(key, state_dim, constraint_dim, hidden_dim=64,
                              dtype=jnp.float32):
    """nn.Linear-equivalent params, stored transposed as (in_features, out_features)."""
    ks = jax.random.split(key, 8)

    def linear(kw, kb, fan_in, fan_out):
        bound = 1.0 / np.sqrt(fan_in)
        w = jax.random.uniform(kw, (fan_in, fan_out), dtype, -bound, bound)
        b = jax.random.uniform(kb, (1, fan_out), dtype, -bound, bound)
        return w, b

    wq, bq = linear(ks[0], ks[1], constraint_dim, hidden_dim)
    wk, bk = linear(ks[2], ks[3], state_dim, hidden_dim)
    wv, bv = linear(ks[4], ks[5], state_dim, hidden_dim)
    wo, bo = linear(ks[6], ks[7], hidden_dim, state_dim)
    return dict(wq=wq, bq=bq, wk=wk, bk=bk, wv=wv, bv=bv, wo=wo, bo=bo)


def pack_attention_net_params(params, state_dim, constraint_dim, hidden_dim,
                              lane=128, sublane=8):
    """One-time weight transform.

    Rows (contraction dim) are padded only to a sublane multiple that covers
    every fan-in plus one bias row; lanes are padded to full 128-wide blocks so
    in-kernel lane slices are vreg-aligned.  Biases and the 1/sqrt(hidden)
    scale are folded in, so the kernel needs no bias input and no scale mul.
    """
    scale = np.float32(1.0 / np.sqrt(hidden_dim))
    act_ones = max(state_dim, constraint_dim)        # activation lane forced to 1.0
    v_ones = hidden_dim                              # V-block lane forced to 1.0
    d_row = sublane * (-(-(max(state_dim, constraint_dim, hidden_dim) + 1) // sublane))
    dl = lane * (-(-max(hidden_dim + 1, state_dim) // lane))

    w = np.zeros((d_row, 4 * dl), np.float32)
    # Q block: scale folded into weights and bias.
    w[0:constraint_dim, 0:hidden_dim] = np.asarray(params["wq"], np.float32) * scale
    w[act_ones, 0:hidden_dim] = np.asarray(params["bq"], np.float32).reshape(-1) * scale
    # K block.
    w[0:state_dim, dl:dl + hidden_dim] = np.asarray(params["wk"], np.float32)
    w[act_ones, dl:dl + hidden_dim] = np.asarray(params["bk"], np.float32).reshape(-1)
    # V block (+ ones column so bo can fold into Wo).
    w[0:state_dim, 2 * dl:2 * dl + hidden_dim] = np.asarray(params["wv"], np.float32)
    w[act_ones, 2 * dl:2 * dl + hidden_dim] = np.asarray(params["bv"], np.float32).reshape(-1)
    w[act_ones, 2 * dl + v_ones] = 1.0
    # O block (+ bias row addressed by the V ones-column).
    w[0:hidden_dim, 3 * dl:3 * dl + state_dim] = np.asarray(params["wo"], np.float32)
    w[v_ones, 3 * dl:3 * dl + state_dim] = np.asarray(params["bo"], np.float32).reshape(-1)

    return dict(w=jnp.asarray(w), d_row=d_row, dl=dl, act_ones=act_ones,
                state_dim=state_dim, constraint_dim=constraint_dim,
                hidden_dim=hidden_dim)


def attention_net_forward(packed, state, constraints):
    """Pallas implementation of AttentionNet.forward (packed params)."""
    if state.ndim == 1:
        state = state[None, :]
    if constraints.ndim == 1:
        constraints = constraints[None, :]
    squeeze_out = state.shape[0] == 1      # torch gate: squeeze(0) iff state batch == 1

    bs = state.shape[0]
    bc = constraints.shape[0]
    d_row = packed["d_row"]
    dl = packed["dl"]
    state_dim = packed["state_dim"]
    constraint_dim = packed["constraint_dim"]
    act_ones = packed["act_ones"]
    rows_pad = 8 * (-(-(bc + bs) // 8))

    # Fused, bias-augmented LHS: rows [0,bc)=constraints, [bc,bc+bs)=state,
    # rest zero; the `act_ones` lane is 1.0 for live rows (bias pickup).
    lhs = jnp.zeros((rows_pad, d_row), jnp.float32)
    lhs = lhs.at[0:bc, 0:constraint_dim].set(constraints.astype(jnp.float32))
    lhs = lhs.at[bc:bc + bs, 0:state_dim].set(state.astype(jnp.float32))
    lhs = lhs.at[0:bc + bs, act_ones].set(1.0)

    vmem = pl.BlockSpec(memory_space=pltpu.MemorySpace.VMEM)

    flops = int(2 * (rows_pad * d_row * 3 * dl      # fused Q|K|V projection
                     + 2 * rows_pad * bs * dl       # Q K^T + weights @ V
                     + rows_pad * d_row * dl))      # output projection
    bytes_accessed = int(4 * (rows_pad * d_row + d_row * 4 * dl + rows_pad * dl))

    out_p = pl.pallas_call(
        functools.partial(_attention_kernel, dl, d_row, bc, bs),
        out_shape=jax.ShapeDtypeStruct((rows_pad, dl), jnp.float32),
        in_specs=[vmem, vmem],
        out_specs=vmem,
        cost_estimate=pl.CostEstimate(flops=flops,
                                      transcendentals=int(rows_pad * bs),
                                      bytes_accessed=bytes_accessed),
    )(lhs, packed["w"])

    out = out_p[0:bc, 0:state_dim]
    if squeeze_out and out.shape[0] == 1:   # torch .squeeze(0) only drops a size-1 dim
        out = out[0]
    return out


def _reference_forward(params, state, constraints):
    """Pure-JAX reference mirroring the PyTorch module exactly (HIGHEST precision)."""
    if state.ndim == 1:
        state = state[None, :]
    if constraints.ndim == 1:
        constraints = constraints[None, :]
    hp = jax.lax.Precision.HIGHEST
    q = jnp.dot(constraints, params["wq"], precision=hp) + params["bq"]
    k = jnp.dot(state, params["wk"], precision=hp) + params["bk"]
    v = jnp.dot(state, params["wv"], precision=hp) + params["bv"]
    scores = jnp.dot(q, k.T, precision=hp) / np.sqrt(k.shape[-1])
    w = jax.nn.softmax(scores, axis=-1)
    out = jnp.dot(jnp.dot(w, v, precision=hp), params["wo"], precision=hp) + params["bo"]
    if state.shape[0] == 1:                          # torch squeeze(0) semantics
        out = out[0] if out.shape[0] == 1 else out
    return out


if __name__ == "__main__":
    # Small shapes consistent with the module's forward:
    #   state:       (batch, state_dim)      = (2, 16)
    #   constraints: (batch, constraint_dim) = (2, 8)
    #   hidden_dim = 32
    batch, state_dim, constraint_dim, hidden_dim = 2, 16, 8, 32

    key = jax.random.PRNGKey(0)
    k_param, k_state, k_cons = jax.random.split(key, 3)

    params = init_attention_net_params(k_param, state_dim, constraint_dim, hidden_dim)
    packed = pack_attention_net_params(params, state_dim, constraint_dim, hidden_dim)

    state = jax.random.normal(k_state, (batch, state_dim), jnp.float32)
    constraints = jax.random.normal(k_cons, (batch, constraint_dim), jnp.float32)

    out = jax.block_until_ready(attention_net_forward(packed, state, constraints))
    ref = jax.block_until_ready(_reference_forward(params, state, constraints))

    assert out.shape == (batch, state_dim), out.shape
    # Exact softmax division restored (no approx reciprocal); everything is f32,
    # so only MXU accumulation-order noise remains.
    np.testing.assert_allclose(np.asarray(out), np.asarray(ref),
                               rtol=1e-4, atol=1e-4)

    print("KERNEL_OK")
</pallas_src>

<mosaic_0001>
module attributes {stable_mosaic.version = 11 : i64} {
  func.func @_attention_kernel(%arg0: memref<8x40xf32, #tpu.memory_space<vmem>>, %arg1: memref<40x512xf32, #tpu.memory_space<vmem>>, %arg2: memref<8x128xf32, #tpu.memory_space<vmem>>) attributes {dimension_semantics = [], scalar_prefetch = 0 : i64, scratch_operands = 0 : i64, tpu.core_type = #tpu.core_type<tc>} {
    %c0 = arith.constant 0 : index
    %c0_0 = arith.constant 0 : index
    %0 = vector.load %arg0[%c0, %c0_0] : memref<8x40xf32, #tpu.memory_space<vmem>>, vector<8x40xf32>
    %c0_1 = arith.constant 0 : index
    %c0_2 = arith.constant 0 : index
    %1 = vector.load %arg1[%c0_1, %c0_2] : memref<40x512xf32, #tpu.memory_space<vmem>>, vector<40x384xf32>
    %cst = arith.constant dense<0.000000e+00> : vector<8x384xf32>
    %2 = tpu.matmul %0, %1, %cst {dimension_numbers = #tpu.dot_dimension_numbers<[1], [0], [0], [1], [0, 0, 1, 1], [], []>} : vector<8x40xf32>, vector<40x384xf32>, vector<8x384xf32> -> vector<8x384xf32>
    %3 = vector.extract_strided_slice %2 {offsets = [0, 0], sizes = [8, 128], strides = [1, 1]} : vector<8x384xf32> to vector<8x128xf32>
    %4 = vector.extract_strided_slice %2 {offsets = [2, 128], sizes = [2, 128], strides = [1, 1]} : vector<8x384xf32> to vector<2x128xf32>
    %5 = vector.extract_strided_slice %2 {offsets = [2, 256], sizes = [2, 128], strides = [1, 1]} : vector<8x384xf32> to vector<2x128xf32>
    %cst_3 = arith.constant dense<0.000000e+00> : vector<8x2xf32>
    %6 = tpu.matmul %3, %4, %cst_3 {dimension_numbers = #tpu.dot_dimension_numbers<[1], [1], [0], [0], [0, 0, 1, 0], [], []>} : vector<8x128xf32>, vector<2x128xf32>, vector<8x2xf32> -> vector<8x2xf32>
    %cst_4 = arith.constant dense<0xFF800000> : vector<8xf32>
    %7 = vector.multi_reduction <maximumf>, %6, %cst_4 [1] : vector<8x2xf32> to vector<8xf32>
    %8 = vector.shape_cast %7 : vector<8xf32> to vector<8x1xf32>
    %9 = vector.broadcast %8 : vector<8x1xf32> to vector<8x2xf32>
    %10 = arith.subf %6, %9 : vector<8x2xf32>
    %11 = math.exp %10 : vector<8x2xf32>
    %cst_5 = arith.constant dense<0.000000e+00> : vector<8xf32>
    %12 = vector.multi_reduction <add>, %11, %cst_5 [1] : vector<8x2xf32> to vector<8xf32>
    %13 = vector.shape_cast %12 : vector<8xf32> to vector<8x1xf32>
    %14 = vector.broadcast %13 : vector<8x1xf32> to vector<8x2xf32>
    %15 = arith.divf %11, %14 : vector<8x2xf32>
    %cst_6 = arith.constant dense<0.000000e+00> : vector<8x128xf32>
    %16 = tpu.matmul %15, %5, %cst_6 {dimension_numbers = #tpu.dot_dimension_numbers<[1], [0], [0], [1], [0, 0, 1, 1], [], []>} : vector<8x2xf32>, vector<2x128xf32>, vector<8x128xf32> -> vector<8x128xf32>
    %17 = vector.extract_strided_slice %16 {offsets = [0, 0], sizes = [8, 40], strides = [1, 1]} : vector<8x128xf32> to vector<8x40xf32>
    %c0_7 = arith.constant 0 : index
    %c384 = arith.constant 384 : index
    %18 = vector.load %arg1[%c0_7, %c384] : memref<40x512xf32, #tpu.memory_space<vmem>>, vector<40x128xf32>
    %cst_8 = arith.constant dense<0.000000e+00> : vector<8x128xf32>
    %19 = tpu.matmul %17, %18, %cst_8 {dimension_numbers = #tpu.dot_dimension_numbers<[1], [0], [0], [1], [0, 0, 1, 1], [], []>} : vector<8x40xf32>, vector<40x128xf32>, vector<8x128xf32> -> vector<8x128xf32>
    %c0_9 = arith.constant 0 : index
    %c0_10 = arith.constant 0 : index
    %20 = vector.load %arg2[%c0_9, %c0_10] : memref<8x128xf32, #tpu.memory_space<vmem>>, vector<8x128xf32>
    tpu.vector_store %arg2[%c0_9, %c0_10], %19 {strides = array<i32>} : memref<8x128xf32, #tpu.memory_space<vmem>>, vector<8x128xf32>,
    return
  }
}

</mosaic_0001>

<llo_original>
// kernel: tpu_custom_call.1
$region0: #{tpu_custom_call.1}
  #allocation0 [shape = 'u32[]', space=smem, size = 0x4, offset = 0x4, fixed_abs, tag = 'smem constant byte address 0x4 - core index']
  #allocation1 [shape = 'u32[144,128]{1,0:T(1,128)}', space=vmem, size = 0x12000, scoped, tag = 'internal scratch']
  %s0 = inlined_call_operand.hbm [shape: f32[8,40], index: 0, kind: input, shape index: {}]
  %s1 = inlined_call_operand.hbm [shape: f32[40,512], index: 1, kind: input, shape index: {}]
  %s2 = inlined_call_operand.hbm [shape: f32[8,128], index: 2, kind: output, shape index: {}]
  %s3 = sld [smem:[#allocation0]]
  $region26: #{tpu_custom_call.1} parent=0
    _
  %s5 = ssub.s32 1, %s3
  %s6 = scalar_select 0, %s5, %s3
  $region1: #{tpu_custom_call.1} parent=0
    #allocation2 [shape = 'u8[4096]{0}', space=vmem, size = 0x1000, scoped, tag = 'input window, operand 0, single buffered']
    #allocation3 [shape = 's32[1]{0}', space=sflag, size = 0x4, scoped, tag = 'scoped memory for tpu_custom_call.1']
    #allocation4 [shape = 's32[1]{0}', space=sflag, size = 0x4, scoped, tag = 'scoped memory for tpu_custom_call.1']
    #allocation5 [shape = 'u8[81920]{0}', space=vmem, size = 0x14000, scoped, tag = 'input window, operand 1, single buffered']
    #allocation6 [shape = 's32[1]{0}', space=sflag, size = 0x4, scoped, tag = 'scoped memory for tpu_custom_call.1']
    #allocation7 [shape = 'u8[4096]{0}', space=vmem, size = 0x1000, scoped, tag = 'output window, operand 0, single buffered']
    %7 = vsyncpa [#allocation3], 0
    %8 = vsyncpa [#allocation6], 0
    %9 = vsyncpa [#allocation4], 0
    // Predicated region
    $region2: #{tpu_custom_call.1} parent=1 // pred_check
      _
    $region3: #{tpu_custom_call.1} parent=1 // pred_check_branch
      %11 = sbr.rel (0) target = $region5
    $region4: #{tpu_custom_call.1} parent=1 // pred_region
      %s13 = ssub.s32 128, 128
      %14 = vsyncadd [#allocation3], %s13
      %s16 = sshll.u32 [#allocation2], 4
      %s17 = int_to_ptr.vmem [resolvable:$true] %s16
      %19 = dma.hbm_to_vmem [thread:$0]  %s0, 128, %s17, [#allocation3]
    $region5: #{tpu_custom_call.1} parent=1 // pred_fallthru
      _
    // Predicated region
    $region6: #{tpu_custom_call.1} parent=1 // pred_check
      _
    $region7: #{tpu_custom_call.1} parent=1 // pred_check_branch
      %21 = sbr.rel (0) target = $region9
    $region8: #{tpu_custom_call.1} parent=1 // pred_region
      %s23 = ssub.s32 2560, 2560
      %24 = vsyncadd [#allocation6], %s23
      %s25 = sshll.u32 [#allocation5], 4
      %s26 = int_to_ptr.vmem [resolvable:$true] %s25
      %31 = dma.hbm_to_vmem [thread:$0]  %s1, 2560, %s26, [#allocation6], 512, 512, 32
    $region9: #{tpu_custom_call.1} parent=1 // pred_fallthru
      _
    // Predicated region
    $region10: #{tpu_custom_call.1} parent=1 // pred_check
      _
    $region11: #{tpu_custom_call.1} parent=1 // pred_check_branch
      %33 = sbr.rel (0) target = $region13
    $region12: #{tpu_custom_call.1} parent=1 // pred_region
      %34 = dma.done [#allocation3], 128
    $region13: #{tpu_custom_call.1} parent=1 // pred_fallthru
      _
    // Predicated region
    $region14: #{tpu_custom_call.1} parent=1 // pred_check
      _
    $region15: #{tpu_custom_call.1} parent=1 // pred_check_branch
      %36 = sbr.rel (0) target = $region17
    $region16: #{tpu_custom_call.1} parent=1 // pred_region
      %37 = dma.done [#allocation6], 2560
    $region17: #{tpu_custom_call.1} parent=1 // pred_fallthru
      _
    %v38 = vld [vmem:[#allocation2] sm:$0xff]
    %v39 = vld [vmem:[#allocation5] sm:$0xff]
    %v40 = vld [vmem:[#allocation5 + $0x8] sm:$0xff]
    %v41 = vld [vmem:[#allocation5 + $0x10] sm:$0xff]
    %v42 = vld [vmem:[#allocation5 + $0x20] sm:$0xff]
    %v43 = vld [vmem:[#allocation5 + $0x28] sm:$0xff]
    %v44 = vld [vmem:[#allocation5 + $0x30] sm:$0xff]
    %v45 = vld [vmem:[#allocation5 + $0x40] sm:$0xff]
    %v46 = vld [vmem:[#allocation5 + $0x48] sm:$0xff]
    %v47 = vld [vmem:[#allocation5 + $0x50] sm:$0xff]
    %v48 = vld [vmem:[#allocation5 + $0x60] sm:$0xff]
    %v49 = vld [vmem:[#allocation5 + $0x68] sm:$0xff]
    %v50 = vld [vmem:[#allocation5 + $0x70] sm:$0xff]
    %v51 = vld [vmem:[#allocation5 + $0x80] sm:$0xff]
    %v52 = vld [vmem:[#allocation5 + $0x88] sm:$0xff]
    %v53 = vld [vmem:[#allocation5 + $0x90] sm:$0xff]
    %vm54 = vcmask 326656
    %v56 = vsel %vm54, %v38, 0
    %58 = vmatprep.subr.mxu0 0.0
    %59 = vmatpush1.msra.mxu0 0.0
    %60 = vmatprep.subr.mxu0 0.0
    %61 = vmatpush1.msra.mxu0 0.0
    %62 = vmatprep.subr.mxu0 0.0
    %63 = vmatpush1.msra.mxu0 0.0
    %64 = vmatprep.subr.mxu0 0.0
    %65 = vmatpush1.msra.mxu0 0.0
    %66 = vmatprep.subr.mxu0 0.0
    %67 = vmatpush1.msra.mxu0 0.0
    %68 = vmatprep.subr.mxu0 0.0
    %69 = vmatpush1.msra.mxu0 0.0
    %70 = vmatprep.subr.mxu0 0.0
    %71 = vmatpush1.msra.mxu0 0.0
    %72 = vmatprep.subr.mxu0 0.0
    %73 = vmatpush1.msra.mxu0 0.0
    %74 = vmatprep.subr.mxu0 0.0
    %75 = vmatpush1.msra.mxu0 0.0
    %76 = vmatprep.subr.mxu0 0.0
    %77 = vmatpush1.msra.mxu0 0.0
    %78 = vmatprep.subr.mxu0 0.0
    %79 = vmatpush1.msra.mxu0 0.0
    %80 = vmatprep.subr.mxu0 %v52
    %81 = vmatpush1.msra.mxu0 %v51
    %82 = vmatprep.subr.mxu0 %v49
    %83 = vmatpush1.msra.mxu0 %v48
    %84 = vmatprep.subr.mxu0 %v46
    %85 = vmatpush1.msra.mxu0 %v45
    %86 = vmatprep.subr.mxu0 %v43
    %87 = vmatpush1.msra.mxu0 %v42
    %88 = vmatprep.subr.mxu0 %v40
    %89 = vmatpush1.msra.mxu0 %v39
    %90 = vmatprep.subr.mxu0 0.0
    %91 = vmatpush2.msra.mxu0 0.0
    %92 = vmatprep.subr.mxu0 0.0
    %93 = vmatpush2.msra.mxu0 0.0
    %94 = vmatprep.subr.mxu0 0.0
    %95 = vmatpush2.msra.mxu0 0.0
    %96 = vmatprep.subr.mxu0 0.0
    %97 = vmatpush2.msra.mxu0 0.0
    %98 = vmatprep.subr.mxu0 0.0
    %99 = vmatpush2.msra.mxu0 0.0
    %100 = vmatprep.subr.mxu0 0.0
    %101 = vmatpush2.msra.mxu0 0.0
    %102 = vmatprep.subr.mxu0 0.0
    %103 = vmatpush2.msra.mxu0 0.0
    %104 = vmatprep.subr.mxu0 0.0
    %105 = vmatpush2.msra.mxu0 0.0
    %106 = vmatprep.subr.mxu0 0.0
    %107 = vmatpush2.msra.mxu0 0.0
    %108 = vmatprep.subr.mxu0 0.0
    %109 = vmatpush2.msra.mxu0 0.0
    %110 = vmatprep.subr.mxu0 0.0
    %111 = vmatpush2.msra.mxu0 0.0
    %112 = vmatprep.subr.mxu0 0.0
    %113 = vmatpush2.msra.mxu0 0.0
    %114 = vmatprep.subr.mxu0 0.0
    %115 = vmatpush2.msra.mxu0 0.0
    %116 = vmatprep.subr.mxu0 0.0
    %117 = vmatpush2.msra.mxu0 0.0
    %118 = vmatprep.subr.mxu0 0.0
    %119 = vmatpush2.msra.mxu0 0.0
    %120 = vmatprep.subr.mxu0 0.0
    %121 = vmatpush2.msra.mxu0 0.0
    %122 = vmatprep.mubr.f32.mxu0 0.0
    %123 = vmatmul.mubr.f32.gmra.mxu0 %v56
    %v124 = vpop.f32.mrf.mxu0
    %v125 = vadd.f32 0.0, %v124
    %v126 = vpop.f32.mrf.mxu0
    %v127 = vadd.f32 0.0, %v126
    %128 = vdwg.mxu0
    %129 = vmatprep.subr.mxu0 0.0
    %130 = vmatpush1.msra.mxu0 0.0
    %131 = vmatprep.subr.mxu0 0.0
    %132 = vmatpush1.msra.mxu0 0.0
    %133 = vmatprep.subr.mxu0 0.0
    %134 = vmatpush1.msra.mxu0 0.0
    %135 = vmatprep.subr.mxu0 0.0
    %136 = vmatpush1.msra.mxu0 0.0
    %137 = vmatprep.subr.mxu0 0.0
    %138 = vmatpush1.msra.mxu0 0.0
    %139 = vmatprep.subr.mxu0 0.0
    %140 = vmatpush1.msra.mxu0 0.0
    %141 = vmatprep.subr.mxu0 0.0
    %142 = vmatpush1.msra.mxu0 0.0
    %143 = vmatprep.subr.mxu0 0.0
    %144 = vmatpush1.msra.mxu0 0.0
    %145 = vmatprep.subr.mxu0 0.0
    %146 = vmatpush1.msra.mxu0 0.0
    %147 = vmatprep.subr.mxu0 0.0
    %148 = vmatpush1.msra.mxu0 0.0
    %149 = vmatprep.subr.mxu0 0.0
    %150 = vmatpush1.msra.mxu0 0.0
    %151 = vmatprep.subr.mxu0 0.0
    %152 = vmatpush1.msra.mxu0 %v53
    %153 = vmatprep.subr.mxu0 0.0
    %154 = vmatpush1.msra.mxu0 %v50
    %155 = vmatprep.subr.mxu0 0.0
    %156 = vmatpush1.msra.mxu0 %v47
    %157 = vmatprep.subr.mxu0 0.0
    %158 = vmatpush1.msra.mxu0 %v44
    %159 = vmatprep.subr.mxu0 0.0
    %160 = vmatpush1.msra.mxu0 %v41
    %161 = vmatprep.subr.mxu0 0.0
    %162 = vmatpush2.msra.mxu0 0.0
    %163 = vmatprep.subr.mxu0 0.0
    %164 = vmatpush2.msra.mxu0 0.0
    %165 = vmatprep.subr.mxu0 0.0
    %166 = vmatpush2.msra.mxu0 0.0
    %167 = vmatprep.subr.mxu0 0.0
    %168 = vmatpush2.msra.mxu0 0.0
    %169 = vmatprep.subr.mxu0 0.0
    %170 = vmatpush2.msra.mxu0 0.0
    %171 = vmatprep.subr.mxu0 0.0
    %172 = vmatpush2.msra.mxu0 0.0
    %173 = vmatprep.subr.mxu0 0.0
    %174 = vmatpush2.msra.mxu0 0.0
    %175 = vmatprep.subr.mxu0 0.0
    %176 = vmatpush2.msra.mxu0 0.0
    %177 = vmatprep.subr.mxu0 0.0
    %178 = vmatpush2.msra.mxu0 0.0
    %179 = vmatprep.subr.mxu0 0.0
    %180 = vmatpush2.msra.mxu0 0.0
    %181 = vmatprep.subr.mxu0 0.0
    %182 = vmatpush2.msra.mxu0 0.0
    %183 = vmatprep.subr.mxu0 0.0
    %184 = vmatpush2.msra.mxu0 0.0
    %185 = vmatprep.subr.mxu0 0.0
    %186 = vmatpush2.msra.mxu0 0.0
    %187 = vmatprep.subr.mxu0 0.0
    %188 = vmatpush2.msra.mxu0 0.0
    %189 = vmatprep.subr.mxu0 0.0
    %190 = vmatpush2.msra.mxu0 0.0
    %191 = vmatprep.subr.mxu0 0.0
    %192 = vmatpush2.msra.mxu0 0.0
    %193 = vmatprep.mubr.f32.mxu0 0.0
    %194 = vmatmul.mubr.f32.gmra.mxu0 %v56
    %v195 = vpop.f32.mrf.mxu0
    %v196 = vadd.f32 0.0, %v195
    %v197 = vpop.f32.mrf.mxu0
    %198 = vdwg.mxu0
    %v200 = vrot.slane %v127, 2
    %202 = vmatprep.subr.mxu0 0.0
    %203 = vmatpush1.xpose.msra.mxu0 0.0
    %204 = vmatprep.subr.mxu0 0.0
    %205 = vmatpush1.xpose.msra.mxu0 0.0
    %206 = vmatprep.subr.mxu0 0.0
    %207 = vmatpush1.xpose.msra.mxu0 0.0
    %208 = vmatprep.subr.mxu0 0.0
    %209 = vmatpush1.xpose.msra.mxu0 0.0
    %210 = vmatprep.subr.mxu0 0.0
    %211 = vmatpush1.xpose.msra.mxu0 0.0
    %212 = vmatprep.subr.mxu0 0.0
    %213 = vmatpush1.xpose.msra.mxu0 0.0
    %214 = vmatprep.subr.mxu0 0.0
    %215 = vmatpush1.xpose.msra.mxu0 0.0
    %216 = vmatprep.subr.mxu0 0.0
    %217 = vmatpush1.xpose.msra.mxu0 0.0
    %218 = vmatprep.subr.mxu0 0.0
    %219 = vmatpush1.xpose.msra.mxu0 0.0
    %220 = vmatprep.subr.mxu0 0.0
    %221 = vmatpush1.xpose.msra.mxu0 0.0
    %222 = vmatprep.subr.mxu0 0.0
    %223 = vmatpush1.xpose.msra.mxu0 0.0
    %224 = vmatprep.subr.mxu0 0.0
    %225 = vmatpush1.xpose.msra.mxu0 0.0
    %226 = vmatprep.subr.mxu0 0.0
    %227 = vmatpush1.xpose.msra.mxu0 0.0
    %228 = vmatprep.subr.mxu0 0.0
    %229 = vmatpush1.xpose.msra.mxu0 0.0
    %230 = vmatprep.subr.mxu0 0.0
    %231 = vmatpush1.xpose.msra.mxu0 0.0
    %232 = vmatprep.subr.mxu0 0.0
    %233 = vmatpush1.xpose.msra.mxu0 %v200
    %234 = vmatprep.subr.mxu0 0.0
    %235 = vmatpush2.xpose.msra.mxu0 0.0
    %236 = vmatprep.subr.mxu0 0.0
    %237 = vmatpush2.xpose.msra.mxu0 0.0
    %238 = vmatprep.subr.mxu0 0.0
    %239 = vmatpush2.xpose.msra.mxu0 0.0
    %240 = vmatprep.subr.mxu0 0.0
    %241 = vmatpush2.xpose.msra.mxu0 0.0
    %242 = vmatprep.subr.mxu0 0.0
    %243 = vmatpush2.xpose.msra.mxu0 0.0
    %244 = vmatprep.subr.mxu0 0.0
    %245 = vmatpush2.xpose.msra.mxu0 0.0
    %246 = vmatprep.subr.mxu0 0.0
    %247 = vmatpush2.xpose.msra.mxu0 0.0
    %248 = vmatprep.subr.mxu0 0.0
    %249 = vmatpush2.xpose.msra.mxu0 0.0
    %250 = vmatprep.subr.mxu0 0.0
    %251 = vmatpush2.xpose.msra.mxu0 0.0
    %252 = vmatprep.subr.mxu0 0.0
    %253 = vmatpush2.xpose.msra.mxu0 0.0
    %254 = vmatprep.subr.mxu0 0.0
    %255 = vmatpush2.xpose.msra.mxu0 0.0
    %256 = vmatprep.subr.mxu0 0.0
    %257 = vmatpush2.xpose.msra.mxu0 0.0
    %258 = vmatprep.subr.mxu0 0.0
    %259 = vmatpush2.xpose.msra.mxu0 0.0
    %260 = vmatprep.subr.mxu0 0.0
    %261 = vmatpush2.xpose.msra.mxu0 0.0
    %262 = vmatprep.subr.mxu0 0.0
    %263 = vmatpush2.xpose.msra.mxu0 0.0
    %264 = vmatprep.subr.mxu0 0.0
    %265 = vmatpush2.xpose.msra.mxu0 0.0
    %266 = vmatprep.mubr.f32.mxu0 0.0
    %267 = vmatmul.mubr.f32.gmra.mxu0 %v125
    %v268 = vpop.f32.mrf.mxu0
    %v269 = vadd.f32 0.0, %v268
    %v270 = vpop.f32.mrf.mxu0
    %271 = vdwg.mxu0
    %vm272 = vcmask 15360
    %v273 = vsel %vm272, %v269, -inf
    %274 = vmax.xlane.f32.xlu0 %v273
    %v275 = vpop.xlane.xlu0 %274
    %v276 = vsub.f32 %v269, %v275
    %v277 = vmul.f32 %v276, 1.442695
    %v278 = vpow.pop %v277
    %v279 = vsel %vm272, %v278, 0.0
    %280 = vadd.xlane.f32.xlu0 %v279
    %v281 = vpop.xlane.xlu0 %280
    %v282 = vrcp.pop %v281
    %v283 = vmul.f32 %v278, %v282
    %v285 = vrot.slane %v196, 2
    %v287 = vsel %vm272, %v283, 0
    %vm289 = vcmask 1041408
    %v290 = vsel %vm289, %v285, 0
    %292 = vmatprep.subr.mxu0 0.0
    %293 = vmatpush1.msra.mxu0 0.0
    %294 = vmatprep.subr.mxu0 0.0
    %295 = vmatpush1.msra.mxu0 0.0
    %296 = vmatprep.subr.mxu0 0.0
    %297 = vmatpush1.msra.mxu0 0.0
    %298 = vmatprep.subr.mxu0 0.0
    %299 = vmatpush1.msra.mxu0 0.0
    %300 = vmatprep.subr.mxu0 0.0
    %301 = vmatpush1.msra.mxu0 0.0
    %302 = vmatprep.subr.mxu0 0.0
    %303 = vmatpush1.msra.mxu0 0.0
    %304 = vmatprep.subr.mxu0 0.0
    %305 = vmatpush1.msra.mxu0 0.0
    %306 = vmatprep.subr.mxu0 0.0
    %307 = vmatpush1.msra.mxu0 0.0
    %308 = vmatprep.subr.mxu0 0.0
    %309 = vmatpush1.msra.mxu0 0.0
    %310 = vmatprep.subr.mxu0 0.0
    %311 = vmatpush1.msra.mxu0 0.0
    %312 = vmatprep.subr.mxu0 0.0
    %313 = vmatpush1.msra.mxu0 0.0
    %314 = vmatprep.subr.mxu0 0.0
    %315 = vmatpush1.msra.mxu0 0.0
    %316 = vmatprep.subr.mxu0 0.0
    %317 = vmatpush1.msra.mxu0 0.0
    %318 = vmatprep.subr.mxu0 0.0
    %319 = vmatpush1.msra.mxu0 0.0
    %320 = vmatprep.subr.mxu0 0.0
    %321 = vmatpush1.msra.mxu0 0.0
    %322 = vmatprep.subr.mxu0 0.0
    %323 = vmatpush1.msra.mxu0 %v290
    %324 = vmatprep.subr.mxu0 0.0
    %325 = vmatpush2.msra.mxu0 0.0
    %326 = vmatprep.subr.mxu0 0.0
    %327 = vmatpush2.msra.mxu0 0.0
    %328 = vmatprep.subr.mxu0 0.0
    %329 = vmatpush2.msra.mxu0 0.0
    %330 = vmatprep.subr.mxu0 0.0
    %331 = vmatpush2.msra.mxu0 0.0
    %332 = vmatprep.subr.mxu0 0.0
    %333 = vmatpush2.msra.mxu0 0.0
    %334 = vmatprep.subr.mxu0 0.0
    %335 = vmatpush2.msra.mxu0 0.0
    %336 = vmatprep.subr.mxu0 0.0
    %337 = vmatpush2.msra.mxu0 0.0
    %338 = vmatprep.subr.mxu0 0.0
    %339 = vmatpush2.msra.mxu0 0.0
    %340 = vmatprep.subr.mxu0 0.0
    %341 = vmatpush2.msra.mxu0 0.0
    %342 = vmatprep.subr.mxu0 0.0
    %343 = vmatpush2.msra.mxu0 0.0
    %344 = vmatprep.subr.mxu0 0.0
    %345 = vmatpush2.msra.mxu0 0.0
    %346 = vmatprep.subr.mxu0 0.0
    %347 = vmatpush2.msra.mxu0 0.0
    %348 = vmatprep.subr.mxu0 0.0
    %349 = vmatpush2.msra.mxu0 0.0
    %350 = vmatprep.subr.mxu0 0.0
    %351 = vmatpush2.msra.mxu0 0.0
    %352 = vmatprep.subr.mxu0 0.0
    %353 = vmatpush2.msra.mxu0 0.0
    %354 = vmatprep.subr.mxu0 0.0
    %355 = vmatpush2.msra.mxu0 0.0
    %356 = vmatprep.mubr.f32.mxu0 0.0
    %357 = vmatmul.mubr.f32.gmra.mxu0 %v287
    %v358 = vpop.f32.mrf.mxu0
    %v359 = vadd.f32 0.0, %v358
    %v360 = vpop.f32.mrf.mxu0
    %361 = vdwg.mxu0
    %v362 = vld [vmem:[#allocation5 + $0x18] sm:$0xff]
    %v363 = vld [vmem:[#allocation5 + $0x38] sm:$0xff]
    %v364 = vld [vmem:[#allocation5 + $0x58] sm:$0xff]
    %v365 = vld [vmem:[#allocation5 + $0x78] sm:$0xff]
    %v366 = vld [vmem:[#allocation5 + $0x98] sm:$0xff]
    %v368 = vsel %vm54, %v359, 0
    %370 = vmatprep.subr.mxu0 0.0
    %371 = vmatpush1.msra.mxu0 0.0
    %372 = vmatprep.subr.mxu0 0.0
    %373 = vmatpush1.msra.mxu0 0.0
    %374 = vmatprep.subr.mxu0 0.0
    %375 = vmatpush1.msra.mxu0 0.0
    %376 = vmatprep.subr.mxu0 0.0
    %377 = vmatpush1.msra.mxu0 0.0
    %378 = vmatprep.subr.mxu0 0.0
    %379 = vmatpush1.msra.mxu0 0.0
    %380 = vmatprep.subr.mxu0 0.0
    %381 = vmatpush1.msra.mxu0 0.0
    %382 = vmatprep.subr.mxu0 0.0
    %383 = vmatpush1.msra.mxu0 0.0
    %384 = vmatprep.subr.mxu0 0.0
    %385 = vmatpush1.msra.mxu0 0.0
    %386 = vmatprep.subr.mxu0 0.0
    %387 = vmatpush1.msra.mxu0 0.0
    %388 = vmatprep.subr.mxu0 0.0
    %389 = vmatpush1.msra.mxu0 0.0
    %390 = vmatprep.subr.mxu0 0.0
    %391 = vmatpush1.msra.mxu0 0.0
    %392 = vmatprep.subr.mxu0 0.0
    %393 = vmatpush1.msra.mxu0 %v366
    %394 = vmatprep.subr.mxu0 0.0
    %395 = vmatpush1.msra.mxu0 %v365
    %396 = vmatprep.subr.mxu0 0.0
    %397 = vmatpush1.msra.mxu0 %v364
    %398 = vmatprep.subr.mxu0 0.0
    %399 = vmatpush1.msra.mxu0 %v363
    %400 = vmatprep.subr.mxu0 0.0
    %401 = vmatpush1.msra.mxu0 %v362
    %402 = vmatprep.subr.mxu0 0.0
    %403 = vmatpush2.msra.mxu0 0.0
    %404 = vmatprep.subr.mxu0 0.0
    %405 = vmatpush2.msra.mxu0 0.0
    %406 = vmatprep.subr.mxu0 0.0
    %407 = vmatpush2.msra.mxu0 0.0
    %408 = vmatprep.subr.mxu0 0.0
    %409 = vmatpush2.msra.mxu0 0.0
    %410 = vmatprep.subr.mxu0 0.0
    %411 = vmatpush2.msra.mxu0 0.0
    %412 = vmatprep.subr.mxu0 0.0
    %413 = vmatpush2.msra.mxu0 0.0
    %414 = vmatprep.subr.mxu0 0.0
    %415 = vmatpush2.msra.mxu0 0.0
    %416 = vmatprep.subr.mxu0 0.0
    %417 = vmatpush2.msra.mxu0 0.0
    %418 = vmatprep.subr.mxu0 0.0
    %419 = vmatpush2.msra.mxu0 0.0
    %420 = vmatprep.subr.mxu0 0.0
    %421 = vmatpush2.msra.mxu0 0.0
    %422 = vmatprep.subr.mxu0 0.0
    %423 = vmatpush2.msra.mxu0 0.0
    %424 = vmatprep.subr.mxu0 0.0
    %425 = vmatpush2.msra.mxu0 0.0
    %426 = vmatprep.subr.mxu0 0.0
    %427 = vmatpush2.msra.mxu0 0.0
    %428 = vmatprep.subr.mxu0 0.0
    %429 = vmatpush2.msra.mxu0 0.0
    %430 = vmatprep.subr.mxu0 0.0
    %431 = vmatpush2.msra.mxu0 0.0
    %432 = vmatprep.subr.mxu0 0.0
    %433 = vmatpush2.msra.mxu0 0.0
    %434 = vmatprep.mubr.f32.mxu0 0.0
    %435 = vmatmul.mubr.f32.gmra.mxu0 %v368
    %v436 = vpop.f32.mrf.mxu0
    %v437 = vadd.f32 0.0, %v436
    %v438 = vpop.f32.mrf.mxu0
    %439 = vdwg.mxu0
    %440 = vst [vmem:[#allocation7] sm:$0xff] %v437
    // Predicated region
    $region18: #{tpu_custom_call.1} parent=1 // pred_check
      _
    $region19: #{tpu_custom_call.1} parent=1 // pred_check_branch
      %442 = sbr.rel (0) target = $region21
    $region20: #{tpu_custom_call.1} parent=1 // pred_region
      %s444 = ssub.s32 128, 128
      %445 = vsyncadd [#allocation4], %s444
      %s447 = sshll.u32 [#allocation7], 4
      %s448 = int_to_ptr.vmem [resolvable:$true] %s447
      %450 = dma.vmem_to_hbm [thread:$0]  %s448, 128, %s2, [#allocation4]
    $region21: #{tpu_custom_call.1} parent=1 // pred_fallthru
      _
    // Predicated region
    $region22: #{tpu_custom_call.1} parent=1 // pred_check
      _
    $region23: #{tpu_custom_call.1} parent=1 // pred_check_branch
      %452 = sbr.rel (0) target = $region25
    $region24: #{tpu_custom_call.1} parent=1 // pred_region
      %453 = dma.done [#allocation4], 128
    $region25: #{tpu_custom_call.1} parent=1 // pred_fallthru
      _
    %454 = vsyncpa [#allocation3], 1
    %455 = vsyncpa [#allocation6], 1
    %456 = vsyncpa [#allocation4], 1

</llo_original>
